<compile_context>
chip_gen: v5e
topology: v5e:2x2
jax: 0.10.0
libtpu: 0.0.40
codegen_flags: <defaults>
</compile_context>

<pallas_src>
import jax
import jax.numpy as jnp
from jax import lax
from jax.experimental import pallas as pl
from jax.experimental.pallas import tpu as pltpu


_VMEM_LIMIT_BYTES = 48 * 1024 * 1024   # <= v7x physical 64 MiB; well under v5e/v6e 128 MiB


# ----------------------------- helpers ------------------------------------ #

def _round_up(a: int, m: int) -> int:
    return (a + m - 1) // m * m


def _cdiv(a: int, b: int) -> int:
    return -(-a // b)


def _sublane(dtype) -> int:
    # Native sublane packing: 8 rows (32-bit), 16 (bf16/f16), 32 (int8/fp8).
    return max(8, 32 // jnp.dtype(dtype).itemsize)


def _pick_tile_b(B: int, D: int, dtype, tile_b=None) -> int:
    """Dtype-aware batch-tile size (bytes-budgeted, sublane-rounded)."""
    itemsize = jnp.dtype(dtype).itemsize
    sub = _sublane(dtype)
    b_full = _round_up(B, sub)
    if tile_b is not None:
        return min(_round_up(max(int(tile_b), sub), sub), b_full)
    # ~4 MiB per input tile buffer: 2 inputs x 2 pipeline buffers ~= 16 MiB,
    # comfortably under the 48 MiB limit we request and v7x's 64 MiB physical.
    target_bytes = 4 * 1024 * 1024
    rows = max(target_bytes // max(D * itemsize, 1), sub)
    tile = max(sub, (rows // sub) * sub)
    return min(tile, b_full)


# ----------------------------- kernels ------------------------------------ #

def _make_mean_kernel(square: bool, inv_n: float, tb: int, tps: int,
                      true_b: int, need_mask: bool):
    """Grid (nsplit, tiles_per_split): per-split partial mean of (x-y)^2 or |x-y|."""

    def kernel(x_ref, y_ref, o_ref, acc_ref):
        c = pl.program_id(0)            # split index ("parallel" axis; 1 core each on v7x)
        i = pl.program_id(1)            # tile index within split ("arbitrary" reduction axis)

        @pl.when(i == 0)
        def _init():
            acc_ref[...] = jnp.zeros_like(acc_ref)

        d = x_ref[...].astype(jnp.float32) - y_ref[...].astype(jnp.float32)
        contrib = d * d if square else jnp.abs(d)

        if need_mask:
            # Mask rows beyond the true batch (clipped last tile reads undefined
            # data; clamped overflow tiles are fully masked). Select, so NaNs in
            # the undefined region cannot leak into the sum.
            row0 = (c * tps + i) * tb
            rows = row0 + lax.broadcasted_iota(jnp.int32, (tb, 1), 0)
            contrib = jnp.where(rows < true_b, contrib, 0.0)

        # Tiny (1, D) accumulator: sublane-reduce the tile (XLU/VPU, no extra
        # tile-sized VMEM read-modify-write per step).
        acc_ref[...] += jnp.sum(contrib, axis=0, keepdims=True)

        @pl.when(i == pl.num_programs(1) - 1)
        def _finalize():
            partial = jnp.sum(acc_ref[...]) * inv_n
            o_ref[...] = jnp.broadcast_to(partial, o_ref.shape)

    return kernel


def _cosine_kernel(x_ref, y_ref, o_ref):
    """Per-row 1 - cos(x, y) along the feature (lane) axis; small (tb, 8) store."""
    x = x_ref[...].astype(jnp.float32)
    y = y_ref[...].astype(jnp.float32)
    dot = jnp.sum(x * y, axis=-1, keepdims=True)      # (tb, 1)
    nx2 = jnp.sum(x * x, axis=-1, keepdims=True)
    ny2 = jnp.sum(y * y, axis=-1, keepdims=True)
    # max(||x||*||y||, 1e-8) == sqrt(max(||x||^2*||y||^2, 1e-16)); fused into one EUP rsqrt.
    inv = lax.rsqrt(jnp.maximum(nx2 * ny2, 1e-16))
    res = 1.0 - dot * inv                             # (tb, 1)
    o_ref[...] = jnp.broadcast_to(res, o_ref.shape)   # (tb, 8): 32 B/row writeback


# ----------------------------- wrapper ------------------------------------ #

class DirectionLoss:
    """JAX/Pallas port of ZSSGAN DirectionLoss."""

    def __init__(self, loss_type: str = "mse", tile_b=None):
        assert loss_type in ("mse", "mae", "cosine")
        self.loss_type = loss_type
        self.tile_b = tile_b   # leave None in production: 1 tile for typical CLIP sizes

    def __call__(self, x: jax.Array, y: jax.Array) -> jax.Array:
        assert x.shape == y.shape and x.ndim == 2, "expected (B, D) inputs"
        B, D = x.shape
        itemsize = jnp.dtype(x.dtype).itemsize

        tb = _pick_tile_b(B, D, x.dtype, self.tile_b)
        n_tiles = _cdiv(B, tb)

        if self.loss_type == "cosine":
            cost = pl.CostEstimate(
                flops=int(7 * B * D),
                transcendentals=int(B),
                bytes_accessed=int(2 * B * D * itemsize + B * 8 * 4),
            )
            out = pl.pallas_call(
                _cosine_kernel,
                out_shape=jax.ShapeDtypeStruct((B, 8), jnp.float32),
                grid_spec=pltpu.PrefetchScalarGridSpec(
                    num_scalar_prefetch=0,
                    grid=(n_tiles,),
                    in_specs=[pl.BlockSpec((tb, D), lambda i: (i, 0)),
                              pl.BlockSpec((tb, D), lambda i: (i, 0))],
                    out_specs=pl.BlockSpec((tb, 8), lambda i: (i, 0)),
                ),
                compiler_params=pltpu.CompilerParams(
                    dimension_semantics=("parallel",),
                    vmem_limit_bytes=_VMEM_LIMIT_BYTES),
                cost_estimate=cost,
            )(x, y)
            return out[:, 0]                          # (B,)

        # ---- mse / mae: scalar mean over the true B*D elements ---- #
        nsplit = 2 if n_tiles >= 2 else 1             # both TensorCores on v7x
        tps = _cdiv(n_tiles, nsplit)
        need_clamp = nsplit * tps > n_tiles           # odd tile count -> clamp block index
        need_mask = need_clamp or (n_tiles * tb > B)  # ragged last tile / overflow tile
        last_block = n_tiles - 1

        if need_clamp:
            def in_map(c, i):
                return (jnp.minimum(c * tps + i, last_block), 0)
        else:
            def in_map(c, i):
                return (c * tps + i, 0)

        kernel = _make_mean_kernel(self.loss_type == "mse", 1.0 / float(B * D),
                                   tb, tps, B, need_mask)
        cost = pl.CostEstimate(
            flops=int(3 * B * D),
            transcendentals=0,
            bytes_accessed=int(2 * B * D * itemsize + nsplit * 8 * 128 * 4),
        )
        out = pl.pallas_call(
            kernel,
            out_shape=jax.ShapeDtypeStruct((nsplit, 8, 128), jnp.float32),
            grid_spec=pltpu.PrefetchScalarGridSpec(
                num_scalar_prefetch=0,
                grid=(nsplit, tps),
                in_specs=[pl.BlockSpec((tb, D), in_map),
                          pl.BlockSpec((tb, D), in_map)],
                out_specs=pl.BlockSpec((1, 8, 128), lambda c, i: (c, 0, 0)),
                scratch_shapes=[pltpu.VMEM((1, D), jnp.float32)],
            ),
            compiler_params=pltpu.CompilerParams(
                dimension_semantics=("parallel", "arbitrary"),
                vmem_limit_bytes=_VMEM_LIMIT_BYTES),
            cost_estimate=cost,
        )(x, y)
        # Each split already scaled its partial by 1/(B*D); sum the partials.
        return jnp.sum(out[:, 0, 0])


# ------------------------------- main -------------------------------------- #

if __name__ == "__main__":
    key = jax.random.PRNGKey(0)
    kx, ky = jax.random.split(key)

    # Small, lane-aligned CLIP-direction-like shapes.
    B, D = 24, 128
    x = jax.random.normal(kx, (B, D), dtype=jnp.float32)
    y = jax.random.normal(ky, (B, D), dtype=jnp.float32)

    ref_mse = jnp.mean((x - y) ** 2)
    ref_mae = jnp.mean(jnp.abs(x - y))
    ref_cos = 1.0 - jnp.sum(x * y, axis=1) / jnp.maximum(
        jnp.linalg.norm(x, axis=1) * jnp.linalg.norm(y, axis=1), 1e-8)

    # Default config: single tile (typical CLIP-loss shapes are step-overhead bound).
    mse = DirectionLoss("mse")(x, y)
    mae = DirectionLoss("mae")(x, y)
    cos = DirectionLoss("cosine")(x, y)
    jax.block_until_ready((mse, mae, cos))
    assert jnp.allclose(mse, ref_mse, rtol=1e-5, atol=1e-6)
    assert jnp.allclose(mae, ref_mae, rtol=1e-5, atol=1e-6)
    assert cos.shape == (B,)
    assert jnp.allclose(cos, ref_cos, rtol=1e-5, atol=1e-5)

    # Forced small tiles: exercises multi-tile pipelining, the 2-way parallel
    # split of the reduction (3 tiles on a 2x2 grid -> clamped index map), and
    # in-kernel masking.
    mse_t = DirectionLoss("mse", tile_b=8)(x, y)
    mae_t = DirectionLoss("mae", tile_b=8)(x, y)
    cos_t = DirectionLoss("cosine", tile_b=8)(x, y)
    jax.block_until_ready((mse_t, mae_t, cos_t))
    assert jnp.allclose(mse_t, ref_mse, rtol=1e-5, atol=1e-6)
    assert jnp.allclose(mae_t, ref_mae, rtol=1e-5, atol=1e-6)
    assert jnp.allclose(cos_t, ref_cos, rtol=1e-5, atol=1e-5)

    # Ragged batch: no wrapper-side padding; clipped last tile masked in-kernel.
    B2 = 10
    x2, y2 = x[:B2], y[:B2]
    mse2 = DirectionLoss("mse")(x2, y2)
    cos2 = DirectionLoss("cosine")(x2, y2)
    jax.block_until_ready((mse2, cos2))
    assert jnp.allclose(mse2, jnp.mean((x2 - y2) ** 2), rtol=1e-5, atol=1e-6)
    assert cos2.shape == (B2,)
    assert jnp.allclose(cos2, ref_cos[:B2], rtol=1e-5, atol=1e-5)

    # bf16 inputs: stay bf16 through the DMA, 16-row sublane-native tile, f32 math.
    xb, yb = x.astype(jnp.bfloat16), y.astype(jnp.bfloat16)
    mse_b = DirectionLoss("mse")(xb, yb)
    cos_b = DirectionLoss("cosine")(xb, yb)
    jax.block_until_ready((mse_b, cos_b))
    xf, yf = xb.astype(jnp.float32), yb.astype(jnp.float32)
    assert jnp.allclose(mse_b, jnp.mean((xf - yf) ** 2), rtol=1e-4, atol=1e-5)
    ref_cos_b = 1.0 - jnp.sum(xf * yf, axis=1) / jnp.maximum(
        jnp.linalg.norm(xf, axis=1) * jnp.linalg.norm(yf, axis=1), 1e-8)
    assert jnp.allclose(cos_b, ref_cos_b, rtol=1e-4, atol=1e-4)

    print("KERNEL_OK")
</pallas_src>

<mosaic_0001>
module attributes {stable_mosaic.version = 11 : i64} {
  func.func @kernel(%arg0: i32, %arg1: i32, %arg2: memref<24x128xf32, #tpu.memory_space<vmem>>, %arg3: memref<24x128xf32, #tpu.memory_space<vmem>>, %arg4: memref<1x8x128xf32, #tpu.memory_space<vmem>>, %arg5: memref<1x128xf32, #tpu.memory_space<vmem>>) attributes {dimension_semantics = [#tpu.dimension_semantics<parallel>, #tpu.dimension_semantics<arbitrary>], iteration_bounds = array<i64: 1, 1>, scalar_prefetch = 0 : i64, scratch_operands = 1 : i64, tpu.core_type = #tpu.core_type<tc>, window_params = [{transform_indices = @transform_0, window_bounds = array<i64: 24, 128>}, {transform_indices = @transform_1, window_bounds = array<i64: 24, 128>}, {transform_indices = @transform_2, window_bounds = array<i64: 1, 8, 128>}]} {
    %c0_i32 = arith.constant 0 : i32
    %0 = arith.cmpi eq, %arg1, %c0_i32 : i32
    %1 = arith.extui %0 : i1 to i32
    %c0_i32_0 = arith.constant 0 : i32
    %2 = arith.cmpi ne, %1, %c0_i32_0 : i32
    scf.if %2 {
      %cst_10 = arith.constant 0.000000e+00 : f32
      %15 = vector.broadcast %cst_10 : f32 to vector<1x128xf32>
      %c0_11 = arith.constant 0 : index
      %c0_12 = arith.constant 0 : index
      %16 = vector.load %arg5[%c0_11, %c0_12] : memref<1x128xf32, #tpu.memory_space<vmem>>, vector<1x128xf32>
      tpu.vector_store %arg5[%c0_11, %c0_12], %15 {strides = array<i32>} : memref<1x128xf32, #tpu.memory_space<vmem>>, vector<1x128xf32>,
    } else {
    }
    %c0 = arith.constant 0 : index
    %c0_1 = arith.constant 0 : index
    %3 = vector.load %arg2[%c0, %c0_1] : memref<24x128xf32, #tpu.memory_space<vmem>>, vector<24x128xf32>
    %c0_2 = arith.constant 0 : index
    %c0_3 = arith.constant 0 : index
    %4 = vector.load %arg3[%c0_2, %c0_3] : memref<24x128xf32, #tpu.memory_space<vmem>>, vector<24x128xf32>
    %5 = arith.subf %3, %4 : vector<24x128xf32>
    %6 = arith.mulf %5, %5 : vector<24x128xf32>
    %c0_4 = arith.constant 0 : index
    %c0_5 = arith.constant 0 : index
    %7 = vector.load %arg5[%c0_4, %c0_5] : memref<1x128xf32, #tpu.memory_space<vmem>>, vector<1x128xf32>
    %cst = arith.constant dense<0.000000e+00> : vector<128xf32>
    %8 = vector.multi_reduction <add>, %6, %cst [0] : vector<24x128xf32> to vector<128xf32>
    %9 = vector.shape_cast %8 : vector<128xf32> to vector<1x128xf32>
    %10 = arith.addf %7, %9 : vector<1x128xf32>
    %c0_6 = arith.constant 0 : index
    %c0_7 = arith.constant 0 : index
    %11 = vector.load %arg5[%c0_6, %c0_7] : memref<1x128xf32, #tpu.memory_space<vmem>>, vector<1x128xf32>
    tpu.vector_store %arg5[%c0_6, %c0_7], %10 {strides = array<i32>} : memref<1x128xf32, #tpu.memory_space<vmem>>, vector<1x128xf32>,
    %c0_i32_8 = arith.constant 0 : i32
    %12 = arith.cmpi eq, %arg1, %c0_i32_8 : i32
    %13 = arith.extui %12 : i1 to i32
    %c0_i32_9 = arith.constant 0 : i32
    %14 = arith.cmpi ne, %13, %c0_i32_9 : i32
    scf.if %14 {
      %c0_10 = arith.constant 0 : index
      %c0_11 = arith.constant 0 : index
      %15 = vector.load %arg5[%c0_10, %c0_11] : memref<1x128xf32, #tpu.memory_space<vmem>>, vector<1x128xf32>
      %16 = vector.shape_cast %15 : vector<1x128xf32> to vector<1x1x128xf32>
      %cst_12 = arith.constant dense<0.000000e+00> : vector<1xf32>
      %17 = vector.multi_reduction <add>, %16, %cst_12 [1, 2] : vector<1x1x128xf32> to vector<1xf32>
      %18 = vector.shape_cast %17 : vector<1xf32> to vector<1x1x1xf32>
      %19 = vector.extract %18[0, 0, 0] : f32 from vector<1x1x1xf32>
      %cst_13 = arith.constant 3.25520843E-4 : f32
      %20 = arith.mulf %19, %cst_13 : f32
      %21 = vector.broadcast %20 : f32 to vector<1x8x128xf32>
      %c0_14 = arith.constant 0 : index
      %c0_15 = arith.constant 0 : index
      %c0_16 = arith.constant 0 : index
      %22 = vector.load %arg4[%c0_14, %c0_15, %c0_16] : memref<1x8x128xf32, #tpu.memory_space<vmem>>, vector<1x8x128xf32>
      tpu.vector_store %arg4[%c0_14, %c0_15, %c0_16], %21 {strides = array<i32>} : memref<1x8x128xf32, #tpu.memory_space<vmem>>, vector<1x8x128xf32>,
    } else {
    }
    return
  }
  func.func @transform_0(%arg0: i32, %arg1: i32) -> (i32, i32) {
    %c1_i32 = arith.constant 1 : i32
    %0 = arith.muli %arg0, %c1_i32 : i32
    %1 = arith.addi %0, %arg1 : i32
    %c0_i32 = arith.constant 0 : i32
    %c0_i32_0 = arith.constant 0 : i32
    return %1, %c0_i32 : i32, i32
  }
  func.func @transform_1(%arg0: i32, %arg1: i32) -> (i32, i32) {
    %c1_i32 = arith.constant 1 : i32
    %0 = arith.muli %arg0, %c1_i32 : i32
    %1 = arith.addi %0, %arg1 : i32
    %c0_i32 = arith.constant 0 : i32
    %c0_i32_0 = arith.constant 0 : i32
    return %1, %c0_i32 : i32, i32
  }
  func.func @transform_2(%arg0: i32, %arg1: i32) -> (i32, i32, i32) {
    %c0_i32 = arith.constant 0 : i32
    %c0_i32_0 = arith.constant 0 : i32
    %c0_i32_1 = arith.constant 0 : i32
    return %arg0, %c0_i32, %c0_i32_0 : i32, i32, i32
  }
}

</mosaic_0001>

<llo_original>
// kernel: tpu_custom_call.1
$region0: #{tpu_custom_call.1}
  #allocation0 [shape = 'u32[]', space=smem, size = 0x4, offset = 0x4, fixed_abs, tag = 'smem constant byte address 0x4 - core index']
  #allocation1 [shape = 'u32[72,128]{1,0:T(1,128)}', space=vmem, size = 0x9000, scoped, tag = 'internal scratch']
  #allocation2 [shape = 'f32[1,128]{1,0:T(1,128)}', space=vmem, size = 0x200, scoped, tag = 'scratch operand']
  %s0 = inlined_call_operand.hbm [shape: f32[24,128], index: 0, kind: input, shape index: {}]
  %s1 = inlined_call_operand.hbm [shape: f32[24,128], index: 1, kind: input, shape index: {}]
  %s2 = inlined_call_operand.hbm [shape: f32[1,8,128], index: 2, kind: output, shape index: {}]
  %s3 = sld [smem:[#allocation0]]
  $region34: #{tpu_custom_call.1} parent=0
    _
  %s5 = ssub.s32 1, %s3
  %s6 = scalar_select 0, %s5, %s3
  $region1: #{tpu_custom_call.1} parent=0
    #allocation3 [shape = 'u8[12288]{0}', space=vmem, size = 0x3000, scoped, tag = 'input window, operand 0, single buffered']
    #allocation4 [shape = 's32[1]{0}', space=sflag, size = 0x4, scoped, tag = 'scoped memory for tpu_custom_call.1']
    #allocation5 [shape = 's32[1]{0}', space=sflag, size = 0x4, scoped, tag = 'scoped memory for tpu_custom_call.1']
    #allocation6 [shape = 'u8[12288]{0}', space=vmem, size = 0x3000, scoped, tag = 'input window, operand 1, single buffered']
    #allocation7 [shape = 's32[1]{0}', space=sflag, size = 0x4, scoped, tag = 'scoped memory for tpu_custom_call.1']
    #allocation8 [shape = 'u8[4096]{0}', space=vmem, size = 0x1000, scoped, tag = 'output window, operand 0, single buffered']
    %7 = vsyncpa [#allocation4], 0
    %8 = vsyncpa [#allocation7], 0
    %9 = vsyncpa [#allocation5], 0
    // Predicated region
    $region2: #{tpu_custom_call.1} parent=1 // pred_check
      _
    $region3: #{tpu_custom_call.1} parent=1 // pred_check_branch
      %11 = sbr.rel (0) target = $region5
    $region4: #{tpu_custom_call.1} parent=1 // pred_region
      %s12 = sadd.s32 0, 0
      %s13 = smul.u32 3, %s12
      %15 = vsyncadd [#allocation4], 0
      %s16 = smul.addr %s13, 8
      %s17 = scalar_lea.hbm %s0, %s16
      %s18 = sshll.u32 %s17, 4
      %s19 = int_to_ptr.hbm [resolvable:$true] %s18
      %s20 = sshll.u32 [#allocation3], 4
      %s21 = int_to_ptr.vmem [resolvable:$true] %s20
      %26 = dma.hbm_to_vmem [thread:$0]  %s19, 384, %s21, [#allocation4], 128, 128, 8
    $region5: #{tpu_custom_call.1} parent=1 // pred_fallthru
      _
    // Predicated region
    $region6: #{tpu_custom_call.1} parent=1 // pred_check
      _
    $region7: #{tpu_custom_call.1} parent=1 // pred_check_branch
      %28 = sbr.rel (0) target = $region9
    $region8: #{tpu_custom_call.1} parent=1 // pred_region
      %s29 = sadd.s32 0, 0
      %s30 = smul.u32 3, %s29
      %32 = vsyncadd [#allocation7], 0
      %s33 = smul.addr %s30, 8
      %s34 = scalar_lea.hbm %s1, %s33
      %s35 = sshll.u32 %s34, 4
      %s36 = int_to_ptr.hbm [resolvable:$true] %s35
      %s37 = sshll.u32 [#allocation6], 4
      %s38 = int_to_ptr.vmem [resolvable:$true] %s37
      %43 = dma.hbm_to_vmem [thread:$0]  %s36, 384, %s38, [#allocation7], 128, 128, 8
    $region9: #{tpu_custom_call.1} parent=1 // pred_fallthru
      _
    // Predicated region
    $region10: #{tpu_custom_call.1} parent=1 // pred_check
      _
    $region11: #{tpu_custom_call.1} parent=1 // pred_check_branch
      %45 = sbr.rel (0) target = $region13
    $region12: #{tpu_custom_call.1} parent=1 // pred_region
      %47 = dma.done [#allocation4], 384
    $region13: #{tpu_custom_call.1} parent=1 // pred_fallthru
      _
    // Predicated region
    $region14: #{tpu_custom_call.1} parent=1 // pred_check
      _
    $region15: #{tpu_custom_call.1} parent=1 // pred_check_branch
      %49 = sbr.rel (0) target = $region17
    $region16: #{tpu_custom_call.1} parent=1 // pred_region
      %51 = dma.done [#allocation7], 384
    $region17: #{tpu_custom_call.1} parent=1 // pred_fallthru
      _
    %s52 = sadd.s32 0, 0
    %s53 = smul.u32 3, %s52
    %s54 = sadd.s32 0, 0
    %s55 = smul.u32 3, %s54
    %p56 = scmp.eq.s32.totalorder 0, 0
    // Predicated region
    $region18: #{tpu_custom_call.1} parent=1 // pred_check
      %p57 = pneg %p56
    $region19: #{tpu_custom_call.1} parent=1 // pred_check_branch
      %59 = sbr.rel (%p57) target = $region21
    $region20: #{tpu_custom_call.1} parent=1 // pred_region
      %60 = vst [vmem:[#allocation2] sm:$0x1] 0.0
    $region21: #{tpu_custom_call.1} parent=1 // pred_fallthru
      _
    %v61 = vld [vmem:[#allocation3] sm:$0xff]
    %v62 = vld [vmem:[#allocation3 + $0x8] sm:$0xff]
    %v63 = vld [vmem:[#allocation3 + $0x10] sm:$0xff]
    %v64 = vld [vmem:[#allocation6] sm:$0xff]
    %v65 = vld [vmem:[#allocation6 + $0x8] sm:$0xff]
    %v66 = vld [vmem:[#allocation6 + $0x10] sm:$0xff]
    %v67 = vsub.f32 %v61, %v64
    %v68 = vsub.f32 %v62, %v65
    %v69 = vsub.f32 %v63, %v66
    %v70 = vmul.f32 %v67, %v67
    %v71 = vmul.f32 %v68, %v68
    %v72 = vmul.f32 %v69, %v69
    %v73 = vld [vmem:[#allocation2] sm:$0x1]
    %v74 = vadd.f32 %v70, %v71
    %v75 = vadd.f32 %v74, %v72
    %v76 = vrot.slane %v75, 4
    %v77 = vadd.f32 %v75, %v76
    %v78 = vrot.slane %v77, 2
    %v79 = vadd.f32 %v77, %v78
    %v80 = vrot.slane %v79, 1
    %v81 = vadd.f32 %v79, %v80
    %v82 = vadd.f32 %v73, %v81
    %83 = vst [vmem:[#allocation2] sm:$0x1] %v82
    // Predicated region
    $region22: #{tpu_custom_call.1} parent=1 // pred_check
      %p84 = pneg %p56
    $region23: #{tpu_custom_call.1} parent=1 // pred_check_branch
      %86 = sbr.rel (%p84) target = $region25
    $region24: #{tpu_custom_call.1} parent=1 // pred_region
      %v87 = vld [vmem:[#allocation2] sm:$0x1]
      %vm88 = vcmask 1040384
      %v89 = vsel %vm88, %v87, 0.0
      %90 = vadd.xlane.f32.xlu0 %v89
      %v91 = vpop.xlane.xlu0 %90
      %v92 = vrot.slane %v91, 4
      %v93 = vadd.f32 %v91, %v92
      %v94 = vrot.slane %v93, 2
      %v95 = vadd.f32 %v93, %v94
      %v96 = vrot.slane %v95, 1
      %v97 = vadd.f32 %v95, %v96
      %s98 = vtos %v97
      %s99 = smul.f32 %s98, 0.00032552084
      %v100 = vstv %s99
      %101 = vst [vmem:[#allocation8] sm:$0xff] %v100
    $region25: #{tpu_custom_call.1} parent=1 // pred_fallthru
      _
    // Predicated region
    $region26: #{tpu_custom_call.1} parent=1 // pred_check
      _
    $region27: #{tpu_custom_call.1} parent=1 // pred_check_branch
      %103 = sbr.rel (0) target = $region29
    $region28: #{tpu_custom_call.1} parent=1 // pred_region
      %105 = vsyncadd [#allocation5], 0
      %s107 = sshll.u32 [#allocation8], 4
      %s108 = int_to_ptr.vmem [resolvable:$true] %s107
      %s109 = sshll.u32 %s2, 4
      %s110 = int_to_ptr.hbm [resolvable:$true] %s109
      %112 = dma.vmem_to_hbm [thread:$0]  %s108, 128, %s110, [#allocation5]
    $region29: #{tpu_custom_call.1} parent=1 // pred_fallthru
      _
    // Predicated region
    $region30: #{tpu_custom_call.1} parent=1 // pred_check
      _
    $region31: #{tpu_custom_call.1} parent=1 // pred_check_branch
      %114 = sbr.rel (0) target = $region33
    $region32: #{tpu_custom_call.1} parent=1 // pred_region
      %116 = dma.done [#allocation5], 128
    $region33: #{tpu_custom_call.1} parent=1 // pred_fallthru
      _
    %117 = vsyncpa [#allocation4], 1
    %118 = vsyncpa [#allocation7], 1
    %119 = vsyncpa [#allocation5], 1

</llo_original>
